<compile_context>
chip_gen: v6e
topology: v6e:2x2x1
jax: 0.10.0
libtpu: 0.0.40
codegen_flags: <defaults>
</compile_context>

<pallas_src>
import functools

import jax
import jax.numpy as jnp
from jax.experimental import pallas as pl
from jax.experimental.pallas import tpu as pltpu

EPS = 1e-5
_ROW_TILE_MAX = 1024                    # 512–1024 is the mem-bound sweet spot
_ROW_ALIGN = 32                         # legal sublane multiple for f32/bf16/int8
_TILE_VMEM_BUDGET = 12 * 1024 * 1024    # budget for (double-buffered) row tiles
_VMEM_LIMIT = 32 * 1024 * 1024          # explicit; safe on v5e/v6e/v7x


def _cdiv(a, b):
    return -(-a // b)


def _round_up(x, m):
    return _cdiv(x, m) * m


def _row_tiling(n, d, itemsize):
    """Pick (row_tile, padded_rows): balanced tiles, bounded VMEM, little waste."""
    n_al = _round_up(max(n, 1), _ROW_ALIGN)
    # ~2x in + 2x out buffers (input dtype) + a few f32 temporaries per row.
    per_row_bytes = max(1, d * (4 * itemsize + 12))
    cap = max(_ROW_ALIGN, (_TILE_VMEM_BUDGET // per_row_bytes) // _ROW_ALIGN * _ROW_ALIGN)
    tile_max = min(_ROW_TILE_MAX, cap, n_al)
    num_tiles = _cdiv(n_al, tile_max)
    tile = _round_up(_cdiv(n_al, num_tiles), _ROW_ALIGN)   # balanced → minimal padding
    return tile, tile * num_tiles


# --------------------- LayerNorm: single tiled pass (per-row stats) ---------------------
def _layernorm_kernel(x_ref, gamma_ref, beta_ref, o_ref):
    x = x_ref[...].astype(jnp.float32)
    inv_d = 1.0 / x.shape[-1]
    mean = jnp.sum(x, axis=-1, keepdims=True) * inv_d            # XLU reduce
    centered = x - mean
    var = jnp.sum(centered * centered, axis=-1, keepdims=True) * inv_d
    inv_std = jax.lax.rsqrt(var + EPS)                           # EUP slot (free-ish)
    o_ref[...] = (centered * inv_std * gamma_ref[...] + beta_ref[...]).astype(o_ref.dtype)


# --------------------- BatchNorm pass 1: tiled sum/sumsq reduction over N ---------------
def _bn_stats_kernel(x_ref, gamma_ref, beta_ref, scale_ref, shift_ref,
                     sum_acc, sumsq_acc, *, n_true):
    @pl.when(pl.program_id(0) == 0)
    def _():
        sum_acc[...] = jnp.zeros_like(sum_acc)
        sumsq_acc[...] = jnp.zeros_like(sumsq_acc)

    x = x_ref[...].astype(jnp.float32)
    sum_acc[...] += jnp.sum(x, axis=0, keepdims=True)
    sumsq_acc[...] += jnp.sum(x * x, axis=0, keepdims=True)

    @pl.when(pl.program_id(0) == pl.num_programs(0) - 1)
    def _():
        inv_n = 1.0 / n_true                                     # padded rows are zero
        mean = sum_acc[...] * inv_n
        var = jnp.maximum(sumsq_acc[...] * inv_n - mean * mean, 0.0)  # biased (BN train)
        inv_std = jax.lax.rsqrt(var + EPS)
        scale = inv_std * gamma_ref[...]                         # fold gamma once per feature
        scale_ref[...] = scale
        shift_ref[...] = beta_ref[...] - mean * scale


# --------------------- BatchNorm pass 2: tiled elementwise apply ------------------------
def _bn_apply_kernel(x_ref, scale_ref, shift_ref, o_ref):
    x = x_ref[...].astype(jnp.float32)
    o_ref[...] = (x * scale_ref[...] + shift_ref[...]).astype(o_ref.dtype)


# --------------------- Wrappers ----------------------------------------------------------
def _prep(x2d, gamma, beta):
    n, d = x2d.shape
    tile_n, n_pad = _row_tiling(n, d, x2d.dtype.itemsize)
    x_p = jnp.pad(x2d, ((0, n_pad - n), (0, 0))) if n_pad != n else x2d
    g_p = gamma.reshape(1, d).astype(jnp.float32)
    b_p = beta.reshape(1, d).astype(jnp.float32)
    return x_p, g_p, b_p, tile_n, n_pad


def _layernorm_pallas(x2d, gamma, beta):
    n, d = x2d.shape
    x_p, g_p, b_p, tile_n, n_pad = _prep(x2d, gamma, beta)
    y = pl.pallas_call(
        _layernorm_kernel,
        out_shape=jax.ShapeDtypeStruct((n_pad, d), x2d.dtype),
        grid=(n_pad // tile_n,),
        in_specs=[
            pl.BlockSpec((tile_n, d), lambda i: (i, 0)),
            pl.BlockSpec((1, d), lambda i: (0, 0)),
            pl.BlockSpec((1, d), lambda i: (0, 0)),
        ],
        out_specs=pl.BlockSpec((tile_n, d), lambda i: (i, 0)),
        compiler_params=pltpu.CompilerParams(
            dimension_semantics=("parallel",),
            vmem_limit_bytes=_VMEM_LIMIT),
    )(x_p, g_p, b_p)
    return y[:n] if n_pad != n else y


def _batchnorm_pallas(x2d, gamma, beta):
    n, d = x2d.shape
    x_p, g_p, b_p, tile_n, n_pad = _prep(x2d, gamma, beta)
    grid = (n_pad // tile_n,)

    # Pass 1: per-feature sum / sumsq reduction -> fused (1, D) scale/shift.
    scale, shift = pl.pallas_call(
        functools.partial(_bn_stats_kernel, n_true=n),
        out_shape=(jax.ShapeDtypeStruct((1, d), jnp.float32),
                   jax.ShapeDtypeStruct((1, d), jnp.float32)),
        grid=grid,
        in_specs=[
            pl.BlockSpec((tile_n, d), lambda i: (i, 0)),
            pl.BlockSpec((1, d), lambda i: (0, 0)),
            pl.BlockSpec((1, d), lambda i: (0, 0)),
        ],
        out_specs=(pl.BlockSpec((1, d), lambda i: (0, 0)),
                   pl.BlockSpec((1, d), lambda i: (0, 0))),
        scratch_shapes=[pltpu.VMEM((1, d), jnp.float32),
                        pltpu.VMEM((1, d), jnp.float32)],
        compiler_params=pltpu.CompilerParams(
            dimension_semantics=("arbitrary",),        # reduction axis: accumulators resident
            vmem_limit_bytes=_VMEM_LIMIT),
    )(x_p, g_p, b_p)

    # Pass 2: y = x*scale + shift, tiled + double-buffered over rows.
    y = pl.pallas_call(
        _bn_apply_kernel,
        out_shape=jax.ShapeDtypeStruct((n_pad, d), x2d.dtype),
        grid=grid,
        in_specs=[
            pl.BlockSpec((tile_n, d), lambda i: (i, 0)),
            pl.BlockSpec((1, d), lambda i: (0, 0)),
            pl.BlockSpec((1, d), lambda i: (0, 0)),
        ],
        out_specs=pl.BlockSpec((tile_n, d), lambda i: (i, 0)),
        compiler_params=pltpu.CompilerParams(
            dimension_semantics=("parallel",),
            vmem_limit_bytes=_VMEM_LIMIT),
    )(x_p, scale, shift)
    return y[:n] if n_pad != n else y


class Normalization:
    """JAX/Pallas port of the PyTorch Normalization module (training-mode math)."""

    def __init__(self, embed_dim, normalization='batch'):
        self.embed_dim = embed_dim
        self.normalization = normalization if normalization in ('batch', 'layer') else None
        # PyTorch defaults: gamma=1, beta=0.
        self.gamma = jnp.ones((embed_dim,), dtype=jnp.float32)
        self.beta = jnp.zeros((embed_dim,), dtype=jnp.float32)

    def __call__(self, x):
        if self.normalization is None:
            return x
        orig_shape = x.shape
        d = orig_shape[-1]
        assert d == self.embed_dim
        x2d = x.reshape(-1, d)
        if self.normalization == 'batch':
            y = _batchnorm_pallas(x2d, self.gamma, self.beta)
        else:  # 'layer'
            y = _layernorm_pallas(x2d, self.gamma, self.beta)
        return y.reshape(orig_shape)


# --------------------- Pure-JAX references ------------------------------------------------
def _batchnorm_ref(x, gamma, beta):
    x2d = x.reshape(-1, x.shape[-1]).astype(jnp.float32)
    mean = jnp.mean(x2d, axis=0, keepdims=True)
    var = jnp.mean((x2d - mean) ** 2, axis=0, keepdims=True)
    y = (x2d - mean) * jax.lax.rsqrt(var + EPS) * gamma + beta
    return y.reshape(x.shape).astype(x.dtype)


def _layernorm_ref(x, gamma, beta):
    xf = x.astype(jnp.float32)
    mean = jnp.mean(xf, axis=-1, keepdims=True)
    var = jnp.mean((xf - mean) ** 2, axis=-1, keepdims=True)
    y = (xf - mean) * jax.lax.rsqrt(var + EPS) * gamma + beta
    return y.astype(x.dtype)


if __name__ == "__main__":
    key = jax.random.PRNGKey(0)
    B, S, D = 2, 8, 32  # batch, seq, embed_dim
    x = jax.random.normal(key, (B, S, D), dtype=jnp.float32)

    # Default variant: BatchNorm1d over flattened (-1, D), training-mode batch stats.
    bn_module = Normalization(D, normalization='batch')
    y_bn = jax.block_until_ready(bn_module(x))
    y_bn_ref = _batchnorm_ref(x, bn_module.gamma, bn_module.beta)
    assert y_bn.shape == x.shape and y_bn.dtype == x.dtype
    assert jnp.allclose(y_bn, y_bn_ref, atol=1e-5, rtol=1e-5)

    # Layer variant: LayerNorm(embed_dim) over the last dim.
    ln_module = Normalization(D, normalization='layer')
    y_ln = jax.block_until_ready(ln_module(x))
    y_ln_ref = _layernorm_ref(x, ln_module.gamma, ln_module.beta)
    assert y_ln.shape == x.shape and y_ln.dtype == x.dtype
    assert jnp.allclose(y_ln, y_ln_ref, atol=1e-5, rtol=1e-5)

    print("KERNEL_OK")
</pallas_src>

<mosaic_0001>
module attributes {stable_mosaic.version = 11 : i64} {
  func.func @_bn_stats_kernel(%arg0: i32, %arg1: memref<32x32xf32, #tpu.memory_space<vmem>>, %arg2: memref<1x32xf32, #tpu.memory_space<vmem>>, %arg3: memref<1x32xf32, #tpu.memory_space<vmem>>, %arg4: memref<1x32xf32, #tpu.memory_space<vmem>>, %arg5: memref<1x32xf32, #tpu.memory_space<vmem>>, %arg6: memref<1x32xf32, #tpu.memory_space<vmem>>, %arg7: memref<1x32xf32, #tpu.memory_space<vmem>>) attributes {dimension_semantics = [#tpu.dimension_semantics<arbitrary>], iteration_bounds = array<i64: 1>, scalar_prefetch = 0 : i64, scratch_operands = 2 : i64, tpu.core_type = #tpu.core_type<tc>, window_params = [{transform_indices = @transform_0, window_bounds = array<i64: 32, 32>}, {pipeline_mode = #tpu.pipeline_mode<synchronous>, transform_indices = @transform_1, window_bounds = array<i64: 1, 32>}, {pipeline_mode = #tpu.pipeline_mode<synchronous>, transform_indices = @transform_2, window_bounds = array<i64: 1, 32>}, {pipeline_mode = #tpu.pipeline_mode<synchronous>, transform_indices = @transform_3, window_bounds = array<i64: 1, 32>}, {pipeline_mode = #tpu.pipeline_mode<synchronous>, transform_indices = @transform_4, window_bounds = array<i64: 1, 32>}]} {
    %c0_i32 = arith.constant 0 : i32
    %0 = arith.cmpi eq, %arg0, %c0_i32 : i32
    %1 = arith.extui %0 : i1 to i32
    %c0_i32_0 = arith.constant 0 : i32
    %2 = arith.cmpi ne, %1, %c0_i32_0 : i32
    scf.if %2 {
      %cst_13 = arith.constant 0.000000e+00 : f32
      %18 = vector.broadcast %cst_13 : f32 to vector<1x32xf32>
      %c0_14 = arith.constant 0 : index
      %c0_15 = arith.constant 0 : index
      %19 = vector.load %arg6[%c0_14, %c0_15] : memref<1x32xf32, #tpu.memory_space<vmem>>, vector<1x32xf32>
      tpu.vector_store %arg6[%c0_14, %c0_15], %18 {strides = array<i32>} : memref<1x32xf32, #tpu.memory_space<vmem>>, vector<1x32xf32>,
      %cst_16 = arith.constant 0.000000e+00 : f32
      %20 = vector.broadcast %cst_16 : f32 to vector<1x32xf32>
      %c0_17 = arith.constant 0 : index
      %c0_18 = arith.constant 0 : index
      %21 = vector.load %arg7[%c0_17, %c0_18] : memref<1x32xf32, #tpu.memory_space<vmem>>, vector<1x32xf32>
      tpu.vector_store %arg7[%c0_17, %c0_18], %20 {strides = array<i32>} : memref<1x32xf32, #tpu.memory_space<vmem>>, vector<1x32xf32>,
    } else {
    }
    %c0 = arith.constant 0 : index
    %c0_1 = arith.constant 0 : index
    %3 = vector.load %arg1[%c0, %c0_1] : memref<32x32xf32, #tpu.memory_space<vmem>>, vector<32x32xf32>
    %c0_2 = arith.constant 0 : index
    %c0_3 = arith.constant 0 : index
    %4 = vector.load %arg6[%c0_2, %c0_3] : memref<1x32xf32, #tpu.memory_space<vmem>>, vector<1x32xf32>
    %cst = arith.constant dense<0.000000e+00> : vector<32xf32>
    %5 = vector.multi_reduction <add>, %3, %cst [0] : vector<32x32xf32> to vector<32xf32>
    %6 = vector.shape_cast %5 : vector<32xf32> to vector<1x32xf32>
    %7 = arith.addf %4, %6 : vector<1x32xf32>
    %c0_4 = arith.constant 0 : index
    %c0_5 = arith.constant 0 : index
    %8 = vector.load %arg6[%c0_4, %c0_5] : memref<1x32xf32, #tpu.memory_space<vmem>>, vector<1x32xf32>
    tpu.vector_store %arg6[%c0_4, %c0_5], %7 {strides = array<i32>} : memref<1x32xf32, #tpu.memory_space<vmem>>, vector<1x32xf32>,
    %c0_6 = arith.constant 0 : index
    %c0_7 = arith.constant 0 : index
    %9 = vector.load %arg7[%c0_6, %c0_7] : memref<1x32xf32, #tpu.memory_space<vmem>>, vector<1x32xf32>
    %10 = arith.mulf %3, %3 : vector<32x32xf32>
    %cst_8 = arith.constant dense<0.000000e+00> : vector<32xf32>
    %11 = vector.multi_reduction <add>, %10, %cst_8 [0] : vector<32x32xf32> to vector<32xf32>
    %12 = vector.shape_cast %11 : vector<32xf32> to vector<1x32xf32>
    %13 = arith.addf %9, %12 : vector<1x32xf32>
    %c0_9 = arith.constant 0 : index
    %c0_10 = arith.constant 0 : index
    %14 = vector.load %arg7[%c0_9, %c0_10] : memref<1x32xf32, #tpu.memory_space<vmem>>, vector<1x32xf32>
    tpu.vector_store %arg7[%c0_9, %c0_10], %13 {strides = array<i32>} : memref<1x32xf32, #tpu.memory_space<vmem>>, vector<1x32xf32>,
    %c0_i32_11 = arith.constant 0 : i32
    %15 = arith.cmpi eq, %arg0, %c0_i32_11 : i32
    %16 = arith.extui %15 : i1 to i32
    %c0_i32_12 = arith.constant 0 : i32
    %17 = arith.cmpi ne, %16, %c0_i32_12 : i32
    scf.if %17 {
      %c0_13 = arith.constant 0 : index
      %c0_14 = arith.constant 0 : index
      %18 = vector.load %arg6[%c0_13, %c0_14] : memref<1x32xf32, #tpu.memory_space<vmem>>, vector<1x32xf32>
      %cst_15 = arith.constant 6.250000e-02 : f32
      %19 = vector.broadcast %cst_15 : f32 to vector<1x32xf32>
      %20 = arith.mulf %18, %19 : vector<1x32xf32>
      %c0_16 = arith.constant 0 : index
      %c0_17 = arith.constant 0 : index
      %21 = vector.load %arg7[%c0_16, %c0_17] : memref<1x32xf32, #tpu.memory_space<vmem>>, vector<1x32xf32>
      %cst_18 = arith.constant 6.250000e-02 : f32
      %22 = vector.broadcast %cst_18 : f32 to vector<1x32xf32>
      %23 = arith.mulf %21, %22 : vector<1x32xf32>
      %24 = arith.mulf %20, %20 : vector<1x32xf32>
      %25 = arith.subf %23, %24 : vector<1x32xf32>
      %cst_19 = arith.constant 0.000000e+00 : f32
      %26 = vector.broadcast %cst_19 : f32 to vector<1x32xf32>
      %27 = arith.maximumf %25, %26 : vector<1x32xf32>
      %cst_20 = arith.constant 9.99999974E-6 : f32
      %28 = vector.broadcast %cst_20 : f32 to vector<1x32xf32>
      %29 = arith.addf %27, %28 : vector<1x32xf32>
      %30 = math.rsqrt %29 : vector<1x32xf32>
      %c0_21 = arith.constant 0 : index
      %c0_22 = arith.constant 0 : index
      %31 = vector.load %arg2[%c0_21, %c0_22] : memref<1x32xf32, #tpu.memory_space<vmem>>, vector<1x32xf32>
      %32 = arith.mulf %30, %31 : vector<1x32xf32>
      %c0_23 = arith.constant 0 : index
      %c0_24 = arith.constant 0 : index
      %33 = vector.load %arg4[%c0_23, %c0_24] : memref<1x32xf32, #tpu.memory_space<vmem>>, vector<1x32xf32>
      tpu.vector_store %arg4[%c0_23, %c0_24], %32 {strides = array<i32>} : memref<1x32xf32, #tpu.memory_space<vmem>>, vector<1x32xf32>,
      %c0_25 = arith.constant 0 : index
      %c0_26 = arith.constant 0 : index
      %34 = vector.load %arg3[%c0_25, %c0_26] : memref<1x32xf32, #tpu.memory_space<vmem>>, vector<1x32xf32>
      %35 = arith.mulf %20, %32 : vector<1x32xf32>
      %36 = arith.subf %34, %35 : vector<1x32xf32>
      %c0_27 = arith.constant 0 : index
      %c0_28 = arith.constant 0 : index
      %37 = vector.load %arg5[%c0_27, %c0_28] : memref<1x32xf32, #tpu.memory_space<vmem>>, vector<1x32xf32>
      tpu.vector_store %arg5[%c0_27, %c0_28], %36 {strides = array<i32>} : memref<1x32xf32, #tpu.memory_space<vmem>>, vector<1x32xf32>,
    } else {
    }
    return
  }
  func.func @transform_0(%arg0: i32) -> (i32, i32) {
    %c0_i32 = arith.constant 0 : i32
    %c0_i32_0 = arith.constant 0 : i32
    return %arg0, %c0_i32 : i32, i32
  }
  func.func @transform_1(%arg0: i32) -> (i32, i32) {
    %c0_i32 = arith.constant 0 : i32
    %c0_i32_0 = arith.constant 0 : i32
    %c0_i32_1 = arith.constant 0 : i32
    return %c0_i32, %c0_i32_0 : i32, i32
  }
  func.func @transform_2(%arg0: i32) -> (i32, i32) {
    %c0_i32 = arith.constant 0 : i32
    %c0_i32_0 = arith.constant 0 : i32
    %c0_i32_1 = arith.constant 0 : i32
    return %c0_i32, %c0_i32_0 : i32, i32
  }
  func.func @transform_3(%arg0: i32) -> (i32, i32) {
    %c0_i32 = arith.constant 0 : i32
    %c0_i32_0 = arith.constant 0 : i32
    %c0_i32_1 = arith.constant 0 : i32
    return %c0_i32, %c0_i32_0 : i32, i32
  }
  func.func @transform_4(%arg0: i32) -> (i32, i32) {
    %c0_i32 = arith.constant 0 : i32
    %c0_i32_0 = arith.constant 0 : i32
    %c0_i32_1 = arith.constant 0 : i32
    return %c0_i32, %c0_i32_0 : i32, i32
  }
}

</mosaic_0001>

<llo_original>
// kernel: tpu_custom_call.1
$region0: #{tpu_custom_call.1}
  #allocation0 [shape = 'u32[]', space=smem, size = 0x4, offset = 0x4, fixed_abs, tag = 'smem constant byte address 0x4 - core index']
  #allocation1 [shape = 'u32[144,128]{1,0:T(1,128)}', space=vmem, size = 0x12000, scoped, tag = 'internal scratch']
  #allocation2 [shape = 'f32[1,32]{1,0:T(1,128)}', space=vmem, size = 0x200, scoped, tag = 'scratch operand']
  #allocation3 [shape = 'f32[1,32]{1,0:T(1,128)}', space=vmem, size = 0x200, scoped, tag = 'scratch operand']
  %s0 = inlined_call_operand.hbm [shape: f32[32,32], index: 0, kind: input, shape index: {}]
  %s1 = inlined_call_operand.vmem [shape: f32[1,32], index: 1, kind: input, shape index: {}]
  %s2 = inlined_call_operand.vmem [shape: f32[1,32], index: 2, kind: input, shape index: {}]
  %s3 = inlined_call_operand.hbm [shape: f32[1,32], index: 3, kind: output, shape index: {0}]
  %s4 = inlined_call_operand.hbm [shape: f32[1,32], index: 4, kind: output, shape index: {1}]
  %5 = xla_tuple %s3, %s4
  %s6 = sld [smem:[#allocation0]]
  $region42: #{tpu_custom_call.1} parent=0
    _
  %s8 = ssub.s32 1, %s6
  %s9 = scalar_select 0, %s8, %s6
  $region1: #{tpu_custom_call.1} parent=0
    #allocation4 [shape = 'u8[16384]{0}', space=vmem, size = 0x4000, scoped, tag = 'input window, operand 0, single buffered']
    #allocation5 [shape = 's32[1]{0}', space=sflag, size = 0x4, scoped, tag = 'scoped memory for tpu_custom_call.1']
    #allocation6 [shape = 's32[1]{0}', space=sflag, size = 0x4, scoped, tag = 'scoped memory for tpu_custom_call.1']
    #allocation7 [shape = 'u8[512]{0}', space=vmem, size = 0x400, scoped, tag = 'output window, operand 0, single buffered']
    #allocation8 [shape = 'u8[512]{0}', space=vmem, size = 0x400, scoped, tag = 'output window, operand 1, single buffered']
    #allocation9 [shape = 's32[1]{0}', space=sflag, size = 0x4, scoped, tag = 'scoped memory for tpu_custom_call.1']
    %10 = vsyncpa [#allocation5], 0
    %11 = vsyncpa [#allocation6], 0
    %12 = vsyncpa [#allocation9], 0
    // Predicated region
    $region2: #{tpu_custom_call.1} parent=1 // pred_check
      _
    $region3: #{tpu_custom_call.1} parent=1 // pred_check_branch
      %14 = sbr.rel (0) target = $region5
    $region4: #{tpu_custom_call.1} parent=1 // pred_region
      %s16 = ssub.s32 512, 512
      %17 = vsyncadd [#allocation5], %s16
      %s18 = sshll.u32 [#allocation4], 4
      %s19 = int_to_ptr.vmem [resolvable:$true] %s18
      %24 = dma.hbm_to_vmem [thread:$0]  %s0, 512, %s19, [#allocation5], 128, 128, 8
    $region5: #{tpu_custom_call.1} parent=1 // pred_fallthru
      _
    // Predicated region
    $region6: #{tpu_custom_call.1} parent=1 // pred_check
      _
    $region7: #{tpu_custom_call.1} parent=1 // pred_check_branch
      %26 = sbr.rel (0) target = $region9
    $region8: #{tpu_custom_call.1} parent=1 // pred_region
      _
    $region9: #{tpu_custom_call.1} parent=1 // pred_fallthru
      _
    // Predicated region
    $region10: #{tpu_custom_call.1} parent=1 // pred_check
      _
    $region11: #{tpu_custom_call.1} parent=1 // pred_check_branch
      %28 = sbr.rel (0) target = $region13
    $region12: #{tpu_custom_call.1} parent=1 // pred_region
      _
    $region13: #{tpu_custom_call.1} parent=1 // pred_fallthru
      _
    // Predicated region
    $region14: #{tpu_custom_call.1} parent=1 // pred_check
      _
    $region15: #{tpu_custom_call.1} parent=1 // pred_check_branch
      %30 = sbr.rel (0) target = $region17
    $region16: #{tpu_custom_call.1} parent=1 // pred_region
      %31 = dma.done [#allocation5], 512
    $region17: #{tpu_custom_call.1} parent=1 // pred_fallthru
      _
    %p32 = scmp.eq.s32.totalorder 0, 0
    // Predicated region
    $region18: #{tpu_custom_call.1} parent=1 // pred_check
      %p33 = pneg %p32
    $region19: #{tpu_custom_call.1} parent=1 // pred_check_branch
      %35 = sbr.rel (%p33) target = $region21
    $region20: #{tpu_custom_call.1} parent=1 // pred_region
      %vm36 = vcmask 253952
      %37 = vst.msk [vmem:[#allocation2] sm:$0x1] %vm36, 0.0
      %38 = vst.msk [vmem:[#allocation3] sm:$0x1] %vm36, 0.0
    $region21: #{tpu_custom_call.1} parent=1 // pred_fallthru
      _
    %v39 = vld [vmem:[#allocation4] sm:$0xff]
    %v40 = vld [vmem:[#allocation4 + $0x8] sm:$0xff]
    %v41 = vld [vmem:[#allocation4 + $0x10] sm:$0xff]
    %v42 = vld [vmem:[#allocation4 + $0x18] sm:$0xff]
    %v43 = vld [vmem:[#allocation2] sm:$0x1]
    %vm44 = vcmask 261120
    %v45 = vsel %vm44, %v39, 0.0
    %v46 = vsel %vm44, %v40, 0.0
    %v47 = vadd.f32 %v45, %v46
    %v48 = vsel %vm44, %v41, 0.0
    %v49 = vadd.f32 %v47, %v48
    %v50 = vsel %vm44, %v42, 0.0
    %v51 = vadd.f32 %v49, %v50
    %v52 = vrot.slane %v51, 4
    %v53 = vadd.f32 %v51, %v52
    %v54 = vrot.slane %v53, 2
    %v55 = vadd.f32 %v53, %v54
    %v56 = vrot.slane %v55, 1
    %v57 = vadd.f32 %v55, %v56
    %v58 = vadd.f32 %v43, %v57
    %vm59 = vcmask 253952
    %60 = vst.msk [vmem:[#allocation2] sm:$0x1] %vm59, %v58
    %v61 = vld [vmem:[#allocation3] sm:$0x1]
    %v62 = vmul.f32 %v39, %v39
    %v63 = vmul.f32 %v40, %v40
    %v64 = vmul.f32 %v41, %v41
    %v65 = vmul.f32 %v42, %v42
    %v66 = vsel %vm44, %v62, 0.0
    %v67 = vsel %vm44, %v63, 0.0
    %v68 = vadd.f32 %v66, %v67
    %v69 = vsel %vm44, %v64, 0.0
    %v70 = vadd.f32 %v68, %v69
    %v71 = vsel %vm44, %v65, 0.0
    %v72 = vadd.f32 %v70, %v71
    %v73 = vrot.slane %v72, 4
    %v74 = vadd.f32 %v72, %v73
    %v75 = vrot.slane %v74, 2
    %v76 = vadd.f32 %v74, %v75
    %v77 = vrot.slane %v76, 1
    %v78 = vadd.f32 %v76, %v77
    %v79 = vadd.f32 %v61, %v78
    %80 = vst.msk [vmem:[#allocation3] sm:$0x1] %vm59, %v79
    // Predicated region
    $region22: #{tpu_custom_call.1} parent=1 // pred_check
      %p81 = pneg %p32
    $region23: #{tpu_custom_call.1} parent=1 // pred_check_branch
      %83 = sbr.rel (%p81) target = $region25
    $region24: #{tpu_custom_call.1} parent=1 // pred_region
      %v84 = vld [vmem:[#allocation2] sm:$0x1]
      %v85 = vmul.f32 %v84, 0.0625
      %v86 = vld [vmem:[#allocation3] sm:$0x1]
      %v87 = vmul.f32 %v86, 0.0625
      %v88 = vmul.f32 %v85, %v85
      %v89 = vsub.f32 %v87, %v88
      %v90 = vmax.f32 %v89, 0.0
      %v91 = vadd.f32 %v90, 1e-05
      %v92 = vrsqrt.pop %v91
      %v93 = vld [vmem:[%s1] sm:$0x1]
      %v94 = vmul.f32 %v92, %v93
      %95 = vst.msk [vmem:[#allocation7] sm:$0x1] %vm59, %v94
      %v96 = vld [vmem:[%s2] sm:$0x1]
      %v97 = vmul.f32 %v85, %v94
      %v98 = vsub.f32 %v96, %v97
      %99 = vst.msk [vmem:[#allocation8] sm:$0x1] %vm59, %v98
    $region25: #{tpu_custom_call.1} parent=1 // pred_fallthru
      _
    // Predicated region
    $region26: #{tpu_custom_call.1} parent=1 // pred_check
      _
    $region27: #{tpu_custom_call.1} parent=1 // pred_check_branch
      %101 = sbr.rel (0) target = $region29
    $region28: #{tpu_custom_call.1} parent=1 // pred_region
      %s103 = ssub.s32 16, 16
      %104 = vsyncadd [#allocation6], %s103
      %s106 = sshll.u32 [#allocation7], 4
      %s107 = int_to_ptr.vmem [resolvable:$true] %s106
      %109 = dma.vmem_to_hbm [thread:$0]  %s107, 16, %s3, [#allocation6]
    $region29: #{tpu_custom_call.1} parent=1 // pred_fallthru
      _
    // Predicated region
    $region30: #{tpu_custom_call.1} parent=1 // pred_check
      _
    $region31: #{tpu_custom_call.1} parent=1 // pred_check_branch
      %111 = sbr.rel (0) target = $region33
    $region32: #{tpu_custom_call.1} parent=1 // pred_region
      %s113 = ssub.s32 16, 16
      %114 = vsyncadd [#allocation9], %s113
      %s116 = sshll.u32 [#allocation8], 4
      %s117 = int_to_ptr.vmem [resolvable:$true] %s116
      %119 = dma.vmem_to_hbm [thread:$0]  %s117, 16, %s4, [#allocation9]
    $region33: #{tpu_custom_call.1} parent=1 // pred_fallthru
      _
    // Predicated region
    $region34: #{tpu_custom_call.1} parent=1 // pred_check
      _
    $region35: #{tpu_custom_call.1} parent=1 // pred_check_branch
      %121 = sbr.rel (0) target = $region37
    $region36: #{tpu_custom_call.1} parent=1 // pred_region
      %122 = dma.done [#allocation6], 16
    $region37: #{tpu_custom_call.1} parent=1 // pred_fallthru
      _
    // Predicated region
    $region38: #{tpu_custom_call.1} parent=1 // pred_check
      _
    $region39: #{tpu_custom_call.1} parent=1 // pred_check_branch
      %124 = sbr.rel (0) target = $region41
    $region40: #{tpu_custom_call.1} parent=1 // pred_region
      %125 = dma.done [#allocation9], 16
    $region41: #{tpu_custom_call.1} parent=1 // pred_fallthru
      _
    %126 = vsyncpa [#allocation5], 1
    %127 = vsyncpa [#allocation6], 1
    %128 = vsyncpa [#allocation9], 1

</llo_original>
